<compile_context>
chip_gen: v5e
topology: v5e:2x2
jax: 0.10.0
libtpu: 0.0.40
codegen_flags: <defaults>
</compile_context>

<pallas_src>
import functools

import jax
import jax.numpy as jnp
from jax.experimental import pallas as pl
from jax.experimental.pallas import tpu as pltpu


def _relu_attention_kernel(x_ref, o_ref, *, scale):
    # Elementwise VPU hot path: ReLU (scalar threshold) + static scale.
    # Compute in f32 so `scale` is never truncated by the input dtype.
    x = x_ref[...]
    y = jnp.maximum(x.astype(jnp.float32), 0.0) * scale
    o_ref[...] = y.astype(o_ref.dtype)


def _sublane_multiple(itemsize: int) -> int:
    # f32 -> 8, bf16/f16 -> 16, int8/fp8 -> 32 (sub-32-bit packs along sublanes).
    return 8 * max(1, 4 // int(itemsize))


def _round_up(x: int, m: int) -> int:
    return ((x + m - 1) // m) * m


def _round_down(x: int, m: int) -> int:
    return (x // m) * m


def _cdiv(a: int, b: int) -> int:
    return (a + b - 1) // b


def _default_block_bytes() -> int:
    # Bigger tiles amortize the ~0.35us per-grid-step cost.  v7x's ~3.2 TB/s
    # HBM makes that overhead relatively larger, so it gets bigger tiles, but
    # its per-core VMEM is only 64 MiB so 4x tile must stay well inside it.
    try:
        vmem = int(getattr(pltpu.get_tpu_info(), "vmem_capacity_bytes", 0))
    except Exception:
        vmem = 0
    if 0 < vmem <= 64 * 1024 * 1024:
        return 6 * 1024 * 1024       # v7x-class
    return 4 * 1024 * 1024           # v5e / v6e (and unknown)


def _choose_view_and_blocks(shape, itemsize, budget_bytes):
    """Pick a lane/sublane-dense 2-D view (rows, cols) of the contiguous tensor
    and a (block_rows, block_cols) tile within the byte budget."""
    total = 1
    for d in shape:
        total *= int(d)
    mult = _sublane_multiple(itemsize)
    # Never let the budget fall below one minimal (mult, 128) tile.
    budget_elems = max(mult * 128, budget_bytes // itemsize)

    # ---- candidate 2-D views: suffix splits of the shape (contiguous reshape
    # is free) plus a few power-of-two column factorizations for 1-D-ish cases.
    row_cands = {1, total}
    prefix = 1
    for d in shape:
        prefix *= int(d)
        row_cands.add(prefix)
    for c in (128, 256, 512, 1024, 2048, 4096, 8192, 16384):
        if total % c == 0:
            row_cands.add(total // c)

    best = None
    for rows in sorted(row_cands):
        cols = total // rows
        if rows * cols != total:
            continue
        lane_util = cols / float(_round_up(cols, 128))   # masked-vst waste
        sub_util = rows / float(_round_up(rows, mult))   # (1,N) view penalty
        perfect = int(cols % 128 == 0 and rows % mult == 0)
        score = (perfect, lane_util * sub_util, cols)    # wider lanes tie-break
        if best is None or score > best[0]:
            best = (score, rows, cols)
    _, rows, cols = best

    # ---- tile shape within the byte budget ----------------------------------
    if cols * mult <= budget_elems:
        block_cols = cols                                 # full lane dim
    else:
        # Column blocking in multiples of 128 (ragged tail handled by Pallas).
        block_cols = max(128, _round_down(budget_elems // mult, 128))
        block_cols = min(block_cols, cols)
    # budget_elems // block_cols >= mult by construction, so the row tile is a
    # sublane multiple and never exceeds the budget.
    block_rows = min(rows, max(mult, _round_down(budget_elems // block_cols, mult)))

    # ---- never emit a single-step grid (megacore sharding / pipelining) -----
    if _cdiv(rows, block_rows) * _cdiv(cols, block_cols) == 1:
        if rows >= 2 * mult:
            block_rows = max(mult, _round_down(rows // 2, mult))
        elif cols >= 256:
            block_cols = _round_up(_cdiv(cols, 2), 128)

    return rows, cols, block_rows, block_cols


def relu_attention(x: jax.Array, n: int = 197, *, block_bytes: int | None = None) -> jax.Array:
    """Pallas implementation of ReluAttention.forward: relu(x) * (1/n)."""
    scale = 1.0 / float(n)
    out_dtype = x.dtype if jnp.issubdtype(x.dtype, jnp.floating) else jnp.float32

    if x.ndim == 0 or x.size == 0:
        return (jnp.maximum(x.astype(jnp.float32), 0.0) * scale).astype(out_dtype)

    if block_bytes is None:
        block_bytes = _default_block_bytes()

    orig_shape = x.shape
    itemsize = jnp.dtype(x.dtype).itemsize
    rows, cols, block_rows, block_cols = _choose_view_and_blocks(
        orig_shape, itemsize, block_bytes)

    grid_r = _cdiv(rows, block_rows)
    grid_c = _cdiv(cols, block_cols)

    # in + out, double-buffered = 4x tile; 6x leaves headroom for compiler
    # scratch.  Cap inside v7x's 64 MiB physical VMEM.
    tile_bytes = block_rows * block_cols * itemsize
    vmem_limit = int(min(64 * 1024 * 1024, max(16 * 1024 * 1024, 6 * tile_bytes)))

    # Contiguous reshape: metadata only, no HBM traffic.
    x2d = x.reshape(rows, cols)

    out2d = pl.pallas_call(
        functools.partial(_relu_attention_kernel, scale=scale),
        out_shape=jax.ShapeDtypeStruct((rows, cols), out_dtype),
        grid_spec=pltpu.PrefetchScalarGridSpec(
            num_scalar_prefetch=0,
            grid=(grid_r, grid_c),
            in_specs=[pl.BlockSpec((block_rows, block_cols), lambda i, j: (i, j))],
            out_specs=pl.BlockSpec((block_rows, block_cols), lambda i, j: (i, j)),
        ),
        compiler_params=pltpu.CompilerParams(
            dimension_semantics=("parallel", "parallel"),
            vmem_limit_bytes=vmem_limit,
        ),
    )(x2d)

    return out2d.reshape(orig_shape)


if __name__ == "__main__":
    key = jax.random.PRNGKey(0)

    # Attention-score-like input: [batch, heads, seq_q, seq_k]
    B, H, S = 2, 4, 16
    x = jax.random.normal(key, (B, H, S, S), dtype=jnp.float32)

    n = 197  # module default scale 1/n
    y = relu_attention(x, n=n)
    jax.block_until_ready(y)

    y_ref = jnp.maximum(x, 0.0) * (1.0 / n)
    assert y.shape == x.shape and y.dtype == x.dtype
    assert jnp.allclose(y, y_ref, atol=1e-6, rtol=1e-6)

    # Second check: ViT-style ragged 197x197 scores with a tiny block budget to
    # exercise the column-blocked / masked-tail path.
    x2 = jax.random.normal(jax.random.PRNGKey(1), (2, 4, 197, 197), dtype=jnp.float32)
    y2 = relu_attention(x2, n=197, block_bytes=64 * 1024)
    jax.block_until_ready(y2)
    y2_ref = jnp.maximum(x2, 0.0) * (1.0 / 197)
    assert y2.shape == x2.shape and y2.dtype == x2.dtype
    assert jnp.allclose(y2, y2_ref, atol=1e-6, rtol=1e-6)

    print("KERNEL_OK")
</pallas_src>

<mosaic_0001>
module attributes {stable_mosaic.version = 11 : i64} {
  func.func @_relu_attention_kernel(%arg0: i32, %arg1: i32, %arg2: memref<8x128xf32, #tpu.memory_space<vmem>>, %arg3: memref<8x128xf32, #tpu.memory_space<vmem>>) attributes {dimension_semantics = [#tpu.dimension_semantics<parallel>, #tpu.dimension_semantics<parallel>], iteration_bounds = array<i64: 1, 2>, scalar_prefetch = 0 : i64, scratch_operands = 0 : i64, tpu.core_type = #tpu.core_type<tc>, window_params = [{transform_indices = @transform_0, window_bounds = array<i64: 8, 128>}, {transform_indices = @transform_1, window_bounds = array<i64: 8, 128>}]} {
    %c0 = arith.constant 0 : index
    %c0_0 = arith.constant 0 : index
    %0 = vector.load %arg2[%c0, %c0_0] : memref<8x128xf32, #tpu.memory_space<vmem>>, vector<8x128xf32>
    %cst = arith.constant 0.000000e+00 : f32
    %1 = vector.broadcast %cst : f32 to vector<8x128xf32>
    %2 = arith.maximumf %0, %1 : vector<8x128xf32>
    %cst_1 = arith.constant 0.00507614203 : f32
    %3 = vector.broadcast %cst_1 : f32 to vector<8x128xf32>
    %4 = arith.mulf %2, %3 : vector<8x128xf32>
    %c0_2 = arith.constant 0 : index
    %c0_3 = arith.constant 0 : index
    %5 = vector.load %arg3[%c0_2, %c0_3] : memref<8x128xf32, #tpu.memory_space<vmem>>, vector<8x128xf32>
    tpu.vector_store %arg3[%c0_2, %c0_3], %4 {strides = array<i32>} : memref<8x128xf32, #tpu.memory_space<vmem>>, vector<8x128xf32>,
    return
  }
  func.func @transform_0(%arg0: i32, %arg1: i32) -> (i32, i32) {
    %c0_i32 = arith.constant 0 : i32
    return %arg0, %arg1 : i32, i32
  }
  func.func @transform_1(%arg0: i32, %arg1: i32) -> (i32, i32) {
    %c0_i32 = arith.constant 0 : i32
    return %arg0, %arg1 : i32, i32
  }
}

</mosaic_0001>

<llo_original>
// kernel: tpu_custom_call.1
$region0: #{tpu_custom_call.1}
  #allocation0 [shape = 'u32[]', space=smem, size = 0x4, offset = 0x4, fixed_abs, tag = 'smem constant byte address 0x4 - core index']
  #allocation1 [shape = 'u32[72,128]{1,0:T(1,128)}', space=vmem, size = 0x9000, scoped, tag = 'internal scratch']
  %s0 = inlined_call_operand.hbm [shape: f32[8,256], index: 0, kind: input, shape index: {}]
  %s1 = inlined_call_operand.hbm [shape: f32[8,256], index: 1, kind: output, shape index: {}]
  %s2 = sld [smem:[#allocation0]]
  $region41: #{tpu_custom_call.1} parent=0
    _
  %s4 = ssub.s32 1, %s2
  %s5 = scalar_select 0, %s4, %s2
  $region1: #{tpu_custom_call.1} parent=0
    #allocation2 [shape = 'u8[8192]{0}', space=vmem, size = 0x2000, scoped, tag = 'input window, operand 0']
    #allocation3 [shape = 's32[2]{0}', space=sflag, size = 0x8, scoped, tag = 'scoped memory for tpu_custom_call.1']
    #allocation4 [shape = 's32[2]{0}', space=sflag, size = 0x8, scoped, tag = 'scoped memory for tpu_custom_call.1']
    #allocation5 [shape = 'u8[8192]{0}', space=vmem, size = 0x2000, scoped, tag = 'output window, operand 0']
    %6 = vsyncpa [#allocation3], 0
    %s7 = scalar_lea.sflag [#allocation3], 1
    %8 = vsyncpa %s7, 0
    %9 = vsyncpa [#allocation4], 0
    %s10 = scalar_lea.sflag [#allocation4], 1
    %11 = vsyncpa %s10, 0
    loop: start=0, step=1, limit=4
    $region2: #{tpu_custom_call.1} parent=1 // loop_pre_header
      _
    $region3: #{tpu_custom_call.1} parent=1 // loop_header
      %s13 = sphi 0, %s17
      %p14 = scmp.ge.s32.totalorder %s13, 4
      %s20 = sphi 0, %s32
      %s21 = sphi 0, %s28
      %s22 = sphi 0, %s20
      %s23 = sphi 0, %s21
      %s24 = sphi 0, %s22
      %s25 = sphi 0, %s23
      %s37 = sphi 0, %s39
      %s40 = sphi 0, %s37
      %s41 = sphi 0, %s40
      %s57 = sphi 0, %s41
      %s65 = sphi 0, %s67
      %s68 = sphi 0, %s65
      %s69 = sphi 0, %s68
      %s85 = sphi 0, %s69
    $region4: #{tpu_custom_call.1} parent=1 // loop_header_branch
      %16 = sbr.rel (%p14) target = $region8
    $region5: #{tpu_custom_call.1} parent=1 // loop_body
      %s18 = ssub.s32 %s13, 1
      %s19 = ssub.s32 %s13, 2
      %s26 = sadd.s32 1, %s21
      %p27 = scmp.ge.s32.totalorder %s26, 2
      %s28 = scalar_select %p27, 0, %s26
      %s29 = sadd.s32 1, %s20
      %s30 = scalar_select %p27, %s29, %s20
      %p31 = scmp.ge.s32.totalorder %s30, 1
      %s32 = scalar_select %p31, 0, %s30
      %s33 = ssub.s32 %s20, %s32
      %s34 = ssub.s32 %s21, %s28
      %s35 = sor.u32 %s33, %s34
      %p36 = scmp.eq.s32.totalorder %s35, 0
      %s38 = sadd.s32 %s37, 1
      %s39 = scalar_select %p36, %s37, %s38
      %p42 = pneg %p36
      %p43 = scmp.eq.s32.totalorder %s13, 1
      %p44 = por %p42, %p43
      %p45 = scmp.ne.s32.totalorder %s37, %s40
      %p46 = scmp.eq.s32.totalorder %s13, 0
      %p47 = por %p45, %p46
      %p48 = scmp.ne.s32.totalorder %s37, %s40
      %p49 = scmp.eq.s32.totalorder %s18, 1
      %p50 = por %p48, %p49
      %p51 = scmp.ne.s32.totalorder %s40, %s41
      %p52 = scmp.eq.s32.totalorder %s18, 0
      %p53 = por %p51, %p52
      %p54 = scmp.ne.s32.totalorder %s40, %s41
      %p55 = scmp.eq.s32.totalorder %s19, 1
      %p56 = por %p54, %p55
      %p58 = scmp.ne.s32.totalorder %s41, %s57
      %p59 = scmp.eq.s32.totalorder %s19, 0
      %p60 = por %p58, %p59
      %s61 = ssub.s32 %s20, %s32
      %s62 = ssub.s32 %s21, %s28
      %s63 = sor.u32 %s61, %s62
      %p64 = scmp.eq.s32.totalorder %s63, 0
      %s66 = sadd.s32 %s65, 1
      %s67 = scalar_select %p64, %s65, %s66
      %p70 = pneg %p64
      %p71 = scmp.eq.s32.totalorder %s13, 1
      %p72 = por %p70, %p71
      %p73 = scmp.ne.s32.totalorder %s65, %s68
      %p74 = scmp.eq.s32.totalorder %s13, 0
      %p75 = por %p73, %p74
      %p76 = scmp.ne.s32.totalorder %s65, %s68
      %p77 = scmp.eq.s32.totalorder %s18, 1
      %p78 = por %p76, %p77
      %p79 = scmp.ne.s32.totalorder %s68, %s69
      %p80 = scmp.eq.s32.totalorder %s18, 0
      %p81 = por %p79, %p80
      %p82 = scmp.ne.s32.totalorder %s68, %s69
      %p83 = scmp.eq.s32.totalorder %s19, 1
      %p84 = por %p82, %p83
      %p86 = scmp.ne.s32.totalorder %s69, %s85
      %p87 = scmp.eq.s32.totalorder %s19, 0
      %p88 = por %p86, %p87
      %p89 = scmp.le.s32.totalorder 1, %s13
      %p90 = scmp.lt.s32.totalorder %s13, 3
      %p91 = pnand %p89, %p90
      %p92 = pneg %p91
      // Predicated region
      $region9: #{tpu_custom_call.1} parent=5 // pred_check
        _
      $region10: #{tpu_custom_call.1} parent=5 // pred_check_branch
        %94 = sbr.rel (%p91) target = $region12
      $region11: #{tpu_custom_call.1} parent=5 // pred_region
        %s95 = ssub.s32 %s13, 1
      $region12: #{tpu_custom_call.1} parent=5 // pred_fallthru
        _
      %p96 = scmp.lt.s32.totalorder %s13, 2
      // Predicated region
      $region13: #{tpu_custom_call.1} parent=5 // pred_check
        %p97 = pneg %p96
      $region14: #{tpu_custom_call.1} parent=5 // pred_check_branch
        %99 = sbr.rel (%p97) target = $region16
      $region15: #{tpu_custom_call.1} parent=5 // pred_region
        // Predicated region
        $region17: #{tpu_custom_call.1} parent=15 // pred_check
          %p100 = pneg %p47
        $region18: #{tpu_custom_call.1} parent=15 // pred_check_branch
          %102 = sbr.rel (%p100) target = $region20
        $region19: #{tpu_custom_call.1} parent=15 // pred_region
          %s103 = sand.u32 %s37, 1
          %s104 = scalar_lea.sflag [#allocation3], %s103
          %s105 = sand.u32 %s37, 1
          %s106 = smul.addr %s105, 8
          %s107 = scalar_lea.vmem [#allocation2], %s106
          %109 = vsyncadd %s104, 0
          %s110 = smul.addr %s20, 2
          %s111 = sadd.s32 %s21, %s110
          %s112 = smul.addr %s111, 8
          %s113 = scalar_lea.hbm %s0, %s112
          %s115 = sshll.u32 %s113, 4
          %s116 = int_to_ptr.hbm [resolvable:$true] %s115
          %s117 = sshll.u32 %s107, 4
          %s118 = int_to_ptr.vmem [resolvable:$true] %s117
          %120 = dma.hbm_to_vmem [thread:$0]  %s116, 128, %s118, %s104
        $region20: #{tpu_custom_call.1} parent=15 // pred_fallthru
          _
      $region16: #{tpu_custom_call.1} parent=5 // pred_fallthru
        _
      %p121 = scmp.le.s32.totalorder 1, %s13
      %p122 = scmp.lt.s32.totalorder %s13, 3
      %p123 = pnand %p121, %p122
      %p124 = pneg %p123
      // Predicated region
      $region21: #{tpu_custom_call.1} parent=5 // pred_check
        _
      $region22: #{tpu_custom_call.1} parent=5 // pred_check_branch
        %126 = sbr.rel (%p123) target = $region24
      $region23: #{tpu_custom_call.1} parent=5 // pred_region
        %s127 = ssub.s32 %s13, 1
        %s128 = sand.u32 %s40, 1
        %s129 = scalar_lea.sflag [#allocation3], %s128
        %s130 = sand.u32 %s40, 1
        %s131 = smul.addr %s130, 8
        %s132 = scalar_lea.vmem [#allocation2], %s131
        // Predicated region
        $region25: #{tpu_custom_call.1} parent=23 // pred_check
          %p133 = pneg %p53
        $region26: #{tpu_custom_call.1} parent=23 // pred_check_branch
          %135 = sbr.rel (%p133) target = $region28
        $region27: #{tpu_custom_call.1} parent=23 // pred_region
          %137 = dma.done %s129, 128
        $region28: #{tpu_custom_call.1} parent=23 // pred_fallthru
          _
        %s138 = sand.u32 %s40, 1
        %s139 = scalar_lea.sflag [#allocation3], %s138
        %s140 = sand.u32 %s40, 1
        %s141 = smul.addr %s140, 8
        %s142 = scalar_lea.vmem [#allocation2], %s141
        %p143 = pneg %p53
        %p144 = pneg %p50
        %p145 = pneg %p81
        %p146 = pneg %p78
        %s147 = sand.u32 %s68, 1
        %s148 = scalar_lea.sflag [#allocation4], %s147
        %s149 = sand.u32 %s68, 1
        %s150 = smul.addr %s149, 8
        %s151 = scalar_lea.vmem [#allocation5], %s150
        %v152 = vld [vmem:[%s132] sm:$0xff]
        %v153 = vmax.f32 %v152, 0.0
        %v154 = vmul.f32 %v153, 0.005076142
        %155 = vst [vmem:[%s151] sm:$0xff] %v154
        %s156 = sand.u32 %s68, 1
        %s157 = scalar_lea.sflag [#allocation4], %s156
        %s158 = sand.u32 %s68, 1
        %s159 = smul.addr %s158, 8
        %s160 = scalar_lea.vmem [#allocation5], %s159
        // Predicated region
        $region29: #{tpu_custom_call.1} parent=23 // pred_check
          %p161 = pneg %p78
        $region30: #{tpu_custom_call.1} parent=23 // pred_check_branch
          %163 = sbr.rel (%p161) target = $region32
        $region31: #{tpu_custom_call.1} parent=23 // pred_region
          %165 = vsyncadd %s157, 0
          %s166 = smul.addr %s22, 2
          %s167 = sadd.s32 %s23, %s166
          %s168 = smul.addr %s167, 8
          %s169 = scalar_lea.hbm %s1, %s168
          %s171 = sshll.u32 %s160, 4
          %s172 = int_to_ptr.vmem [resolvable:$true] %s171
          %s173 = sshll.u32 %s169, 4
          %s174 = int_to_ptr.hbm [resolvable:$true] %s173
          %176 = dma.vmem_to_hbm [thread:$0]  %s172, 128, %s174, %s157
        $region32: #{tpu_custom_call.1} parent=23 // pred_fallthru
          _
      $region24: #{tpu_custom_call.1} parent=5 // pred_fallthru
        _
      %p177 = scmp.le.s32.totalorder 2, %s13
      // Predicated region
      $region33: #{tpu_custom_call.1} parent=5 // pred_check
        %p178 = pneg %p177
      $region34: #{tpu_custom_call.1} parent=5 // pred_check_branch
        %180 = sbr.rel (%p178) target = $region36
      $region35: #{tpu_custom_call.1} parent=5 // pred_region
        %s181 = ssub.s32 %s13, 2
        // Predicated region
        $region37: #{tpu_custom_call.1} parent=35 // pred_check
          %p182 = pneg %p84
        $region38: #{tpu_custom_call.1} parent=35 // pred_check_branch
          %184 = sbr.rel (%p182) target = $region40
        $region39: #{tpu_custom_call.1} parent=35 // pred_region
          %s185 = sand.u32 %s69, 1
          %s186 = scalar_lea.sflag [#allocation4], %s185
          %s187 = sand.u32 %s69, 1
          %s188 = smul.addr %s187, 8
          %s189 = scalar_lea.vmem [#allocation5], %s188
          %191 = dma.done %s186, 128
        $region40: #{tpu_custom_call.1} parent=35 // pred_fallthru
          _
      $region36: #{tpu_custom_call.1} parent=5 // pred_fallthru
        _
    $region6: #{tpu_custom_call.1} parent=1 // loop_footer
      %s17 = sadd.s32 1, %s13
    $region7: #{tpu_custom_call.1} parent=1 // loop_footer_branch
      %12 = sbr.rel target = $region3
    $region8: #{tpu_custom_call.1} parent=1 // loop_exit
      _
    %192 = vsyncpa [#allocation3], 1
    %s193 = scalar_lea.sflag [#allocation3], 1
    %194 = vsyncpa %s193, 1
    %195 = vsyncpa [#allocation4], 1
    %s196 = scalar_lea.sflag [#allocation4], 1
    %197 = vsyncpa %s196, 1

</llo_original>
